<compile_context>
chip_gen: v6e
topology: v6e:2x2x1
jax: 0.10.0
libtpu: 0.0.40
codegen_flags: <defaults>
</compile_context>

<pallas_src>
import functools

import jax
import jax.numpy as jnp
from jax import lax
from jax.experimental import pallas as pl
from jax.experimental.pallas import tpu as pltpu


def _resblock2_kernel(x_ref, w1_ref, b1_ref, w2_ref, b2_ref, alpha_ref, o_ref,
                      *, NB, Cp, H, W, K, res_scale):
    """One grid step = NB images, channel-padded, in lane-dense (Cp, H*W) layout.

    x_ref     : (NB, Cp, H*W)     input block (VMEM, NCHW-flat, channel-padded)
    w1_ref    : (Cp, K*K*Cp)      conv1 weights, column r = (dy*K + dx)*Cp + ci
    b1_ref    : (Cp, 1)           conv1 bias
    w2_ref    : (Cp, K*K*Cp)      conv2 weights
    b2_ref    : (Cp, 1)           conv2 bias
    alpha_ref : (Cp, 1)           PReLU slope (broadcast if num_parameters == 1)
    o_ref     : (NB, Cp, H*W)     output block
    """
    HW = H * W
    pad = K // 2
    f32 = jnp.float32
    KKC = K * K * Cp

    # Per-tap flat lane shift + combined validity mask (vertical edge handled by
    # the flat-index range check, horizontal edge by the column check).  Shape
    # (1, 1, HW) so it broadcasts over the whole (NB, Cp, HW) block.
    flat = lax.broadcasted_iota(jnp.int32, (1, 1, HW), 2)
    coli = flat % W
    shifts, masks = [], []
    for dy in range(K):
        dyo = dy - pad
        for dx in range(K):
            dxo = dx - pad
            s = dyo * W + dxo
            shifts.append(s)
            if s == 0:
                masks.append(None)
            else:
                valid = ((flat + s >= 0) & (flat + s < HW) &
                         (coli + dxo >= 0) & (coli + dxo < W))
                masks.append(valid.astype(f32))

    def im2col(v):
        # v: (NB, Cp, HW) f32  ->  (NB, K*K*Cp, HW) patch tensor.
        # pltpu.roll is an XLU lane rotation (in-vreg); wrapped lanes are zeroed
        # by the validity mask.  Tap concatenation along sublanes is tile-aligned
        # because each tap contributes exactly Cp (multiple of 8) rows.
        taps = []
        for s, m in zip(shifts, masks):
            t = v if s == 0 else pltpu.roll(v, (-s) % HW, 2)
            if m is not None:
                t = t * m
            taps.append(t)
        return jnp.concatenate(taps, axis=1)

    x = x_ref[...].astype(f32)                                  # (NB, Cp, HW)
    w1 = jnp.broadcast_to(w1_ref[...][None], (NB, Cp, KKC))     # tiny, hoisted
    w2 = jnp.broadcast_to(w2_ref[...][None], (NB, Cp, KKC))
    b1 = b1_ref[...][None]                                      # (1, Cp, 1)
    b2 = b2_ref[...][None]
    alpha = alpha_ref[...][None]

    # ---- conv1 + bias + PReLU (batched MXU contraction, f32 accumulate) ----
    h1 = jnp.einsum('bok,bkp->bop', w1, im2col(x),
                    preferred_element_type=f32) + b1
    mid = jnp.where(h1 > 0, h1, alpha * h1)

    # ---- conv2 + bias ----
    h2 = jnp.einsum('bok,bkp->bop', w2, im2col(mid),
                    preferred_element_type=f32) + b2

    # ---- residual + single full-block lane-dense store ----
    o_ref[...] = (h2 * res_scale + x).astype(o_ref.dtype)


def resblock2_pallas(x_nchw, w1_oihw, b1, w2_oihw, b2, alpha, res_scale, K,
                     vmem_budget_bytes=40 * 2**20):
    N, C, H, W = x_nchw.shape
    Cout = w2_oihw.shape[0]
    assert Cout == C, "residual add in ResBlock2 requires n_feats_out == n_feats"
    HW = H * W
    Cp = ((C + 7) // 8) * 8          # pad channels to full 8-sublane tiles

    # NCHW -> NCHW-flat, channel-padded (DMA bytes unchanged: the (8,128) layout
    # would pad 4->8 sublanes anyway; this makes the in-kernel tiles aligned).
    x_flat = x_nchw.reshape(N, C, HW)
    if Cp != C:
        x_flat = jnp.pad(x_flat, ((0, 0), (0, Cp - C), (0, 0)))

    # PyTorch (O, I, kH, kW) -> (Cp, K*K*Cp) with column r = (dy*K + dx)*Cp + ci,
    # matching the kernel's tap-major / channel-minor im2col row ordering.
    def prep_w(w):
        wt = jnp.transpose(w, (0, 2, 3, 1)).astype(jnp.float32)   # (O,kH,kW,I)
        wt = jnp.pad(wt, ((0, Cp - C), (0, 0), (0, 0), (0, Cp - C)))
        return wt.reshape(Cp, K * K * Cp)

    w1m = prep_w(w1_oihw)
    w2m = prep_w(w2_oihw)
    b1v = jnp.pad(b1.reshape(C, 1).astype(jnp.float32), ((0, Cp - C), (0, 0)))
    b2v = jnp.pad(b2.reshape(C, 1).astype(jnp.float32), ((0, Cp - C), (0, 0)))
    # PReLU slope: supports num_parameters == 1 (broadcast) or == C.
    alpha_v = jnp.broadcast_to(
        jnp.asarray(alpha, jnp.float32).reshape(-1, 1), (C, 1))
    alpha_v = jnp.pad(alpha_v, ((0, Cp - C), (0, 0)))

    # ---- pick NB (images per step) against a VMEM budget; keep grid >= 2 so
    # v7x can shard the parallel axis over both TensorCores.
    itemsize = jnp.dtype(x_nchw.dtype).itemsize

    def step_bytes(nb):
        blk = nb * Cp * HW * itemsize                # one in / out block
        patches = nb * K * K * Cp * HW * 4           # live f32 im2col tensor
        work = 4 * nb * Cp * HW * 4                  # x, h1/mid, h2, out (f32)
        return 2 * 2 * blk + patches + work          # double-buffered in + out

    NB = 1
    for nb in range(1, N + 1):
        if N % nb:
            continue
        if N >= 2 and N // nb < 2:                   # keep >= 2 grid steps
            continue
        if step_bytes(nb) > vmem_budget_bytes:
            continue
        NB = nb

    vmem_limit = int(min(56 * 2**20, max(32 * 2**20, 2 * step_bytes(NB))))

    kernel = functools.partial(_resblock2_kernel, NB=NB, Cp=Cp, H=H, W=W, K=K,
                               res_scale=float(res_scale))

    out_flat = pl.pallas_call(
        kernel,
        out_shape=jax.ShapeDtypeStruct((N, Cp, HW), x_nchw.dtype),
        grid=(N // NB,),
        in_specs=[
            pl.BlockSpec((NB, Cp, HW), lambda b: (b, 0, 0)),
            pl.BlockSpec((Cp, K * K * Cp), lambda b: (0, 0)),
            pl.BlockSpec((Cp, 1), lambda b: (0, 0)),
            pl.BlockSpec((Cp, K * K * Cp), lambda b: (0, 0)),
            pl.BlockSpec((Cp, 1), lambda b: (0, 0)),
            pl.BlockSpec((Cp, 1), lambda b: (0, 0)),
        ],
        out_specs=pl.BlockSpec((NB, Cp, HW), lambda b: (b, 0, 0)),
        compiler_params=pltpu.CompilerParams(
            dimension_semantics=("parallel",),
            vmem_limit_bytes=vmem_limit),
    )(x_flat, w1m, b1v, w2m, b2v, alpha_v)

    # Drop padded channels and restore NCHW.
    return out_flat[:, :C, :].reshape(N, C, H, W)


def resblock2_reference(x, w1, b1, w2, b2, alpha, res_scale):
    """Pure-JAX NCHW reference (PyTorch Conv2d = cross-correlation)."""
    dn = ('NCHW', 'OIHW', 'NCHW')
    y = lax.conv_general_dilated(x, w1, (1, 1), 'SAME', dimension_numbers=dn,
                                 precision=lax.Precision.HIGHEST)
    y = y + b1[None, :, None, None]
    y = jnp.where(y > 0, y, alpha * y)
    z = lax.conv_general_dilated(y, w2, (1, 1), 'SAME', dimension_numbers=dn,
                                 precision=lax.Precision.HIGHEST)
    z = z + b2[None, :, None, None]
    return z * res_scale + x


if __name__ == "__main__":
    # Shapes implied by the module: NCHW input, n_feats = n_feats_out = 4, k = 3.
    N, C, H, W = 2, 4, 16, 16
    K = 3
    alpha = 0.25       # nn.PReLU() default init (num_parameters=1)
    res_scale = 1.0    # ResBlock2 default

    key = jax.random.PRNGKey(0)
    k0, k1, k2, k3, k4 = jax.random.split(key, 5)
    x_nchw = jax.random.normal(k0, (N, C, H, W), jnp.float32)
    # PyTorch Conv2d weight layout: (Cout, Cin, kH, kW)
    w1_oihw = jax.random.normal(k1, (C, C, K, K), jnp.float32) * 0.1
    b1 = jax.random.normal(k2, (C,), jnp.float32) * 0.1
    w2_oihw = jax.random.normal(k3, (C, C, K, K), jnp.float32) * 0.1
    b2 = jax.random.normal(k4, (C,), jnp.float32) * 0.1

    out_nchw = resblock2_pallas(x_nchw, w1_oihw, b1, w2_oihw, b2,
                                alpha, res_scale, K)
    jax.block_until_ready(out_nchw)

    ref_nchw = resblock2_reference(x_nchw, w1_oihw, b1, w2_oihw, b2,
                                   alpha, res_scale)
    max_err = float(jnp.max(jnp.abs(out_nchw - ref_nchw)))
    assert max_err < 1e-4, f"mismatch vs reference, max abs err = {max_err}"

    print("KERNEL_OK")
</pallas_src>

<mosaic_0001>
module attributes {stable_mosaic.version = 11 : i64} {
  func.func @_resblock2_kernel(%arg0: i32, %arg1: memref<1x8x256xf32, #tpu.memory_space<vmem>>, %arg2: memref<8x72xf32, #tpu.memory_space<vmem>>, %arg3: memref<8x1xf32, #tpu.memory_space<vmem>>, %arg4: memref<8x72xf32, #tpu.memory_space<vmem>>, %arg5: memref<8x1xf32, #tpu.memory_space<vmem>>, %arg6: memref<8x1xf32, #tpu.memory_space<vmem>>, %arg7: memref<1x8x256xf32, #tpu.memory_space<vmem>>) attributes {dimension_semantics = [#tpu.dimension_semantics<parallel>], iteration_bounds = array<i64: 2>, scalar_prefetch = 0 : i64, scratch_operands = 0 : i64, tpu.core_type = #tpu.core_type<tc>, window_params = [{transform_indices = @transform_0, window_bounds = array<i64: 1, 8, 256>}, {pipeline_mode = #tpu.pipeline_mode<synchronous>, transform_indices = @transform_1, window_bounds = array<i64: 8, 72>}, {pipeline_mode = #tpu.pipeline_mode<synchronous>, transform_indices = @transform_2, window_bounds = array<i64: 8, 1>}, {pipeline_mode = #tpu.pipeline_mode<synchronous>, transform_indices = @transform_3, window_bounds = array<i64: 8, 72>}, {pipeline_mode = #tpu.pipeline_mode<synchronous>, transform_indices = @transform_4, window_bounds = array<i64: 8, 1>}, {pipeline_mode = #tpu.pipeline_mode<synchronous>, transform_indices = @transform_5, window_bounds = array<i64: 8, 1>}, {transform_indices = @transform_6, window_bounds = array<i64: 1, 8, 256>}]} {
    %0 = tpu.iota {dimensions = array<i32: 2>} : vector<1x1x256xi32>
    %c16_i32 = arith.constant 16 : i32
    %c0_i32 = arith.constant 0 : i32
    %1 = arith.cmpi eq, %c16_i32, %c0_i32 : i32
    %c1_i32 = arith.constant 1 : i32
    %2 = arith.select %1, %c1_i32, %c16_i32 : i32
    %3 = vector.broadcast %2 : i32 to vector<1x1x256xi32>
    %4 = arith.remsi %0, %3 : vector<1x1x256xi32>
    %c0_i32_0 = arith.constant 0 : i32
    %5 = vector.broadcast %c0_i32_0 : i32 to vector<1x1x256xi32>
    %6 = arith.cmpi ne, %4, %5 : vector<1x1x256xi32>
    %c0_i32_1 = arith.constant 0 : i32
    %7 = vector.broadcast %c0_i32_1 : i32 to vector<1x1x256xi32>
    %8 = arith.cmpi slt, %4, %7 : vector<1x1x256xi32>
    %c0_i32_2 = arith.constant 0 : i32
    %9 = arith.cmpi slt, %2, %c0_i32_2 : i32
    %10 = vector.broadcast %9 : i1 to vector<1x1x256xi1>
    %11 = vector.broadcast %10 : vector<1x1x256xi1> to vector<1x1x256xi1>
    %12 = arith.xori %8, %11 : vector<1x1x256xi1>
    %13 = arith.andi %12, %6 : vector<1x1x256xi1>
    %14 = vector.broadcast %2 : i32 to vector<1x1x256xi32>
    %15 = arith.addi %4, %14 : vector<1x1x256xi32>
    %16 = arith.select %13, %15, %4 : vector<1x1x256xi1>, vector<1x1x256xi32>
    %c-17_i32 = arith.constant -17 : i32
    %17 = vector.broadcast %c-17_i32 : i32 to vector<1x1x256xi32>
    %18 = arith.addi %0, %17 : vector<1x1x256xi32>
    %c0_i32_3 = arith.constant 0 : i32
    %19 = vector.broadcast %c0_i32_3 : i32 to vector<1x1x256xi32>
    %20 = arith.cmpi sge, %18, %19 : vector<1x1x256xi32>
    %c-17_i32_4 = arith.constant -17 : i32
    %21 = vector.broadcast %c-17_i32_4 : i32 to vector<1x1x256xi32>
    %22 = arith.addi %0, %21 : vector<1x1x256xi32>
    %c256_i32 = arith.constant 256 : i32
    %23 = vector.broadcast %c256_i32 : i32 to vector<1x1x256xi32>
    %24 = arith.cmpi slt, %22, %23 : vector<1x1x256xi32>
    %25 = arith.andi %20, %24 : vector<1x1x256xi1>
    %c-1_i32 = arith.constant -1 : i32
    %26 = vector.broadcast %c-1_i32 : i32 to vector<1x1x256xi32>
    %27 = arith.addi %16, %26 : vector<1x1x256xi32>
    %c0_i32_5 = arith.constant 0 : i32
    %28 = vector.broadcast %c0_i32_5 : i32 to vector<1x1x256xi32>
    %29 = arith.cmpi sge, %27, %28 : vector<1x1x256xi32>
    %30 = arith.andi %25, %29 : vector<1x1x256xi1>
    %c-1_i32_6 = arith.constant -1 : i32
    %31 = vector.broadcast %c-1_i32_6 : i32 to vector<1x1x256xi32>
    %32 = arith.addi %16, %31 : vector<1x1x256xi32>
    %c16_i32_7 = arith.constant 16 : i32
    %33 = vector.broadcast %c16_i32_7 : i32 to vector<1x1x256xi32>
    %34 = arith.cmpi slt, %32, %33 : vector<1x1x256xi32>
    %35 = arith.andi %30, %34 : vector<1x1x256xi1>
    %36 = arith.extui %35 : vector<1x1x256xi1> to vector<1x1x256xi32>
    %37 = arith.sitofp %36 : vector<1x1x256xi32> to vector<1x1x256xf32>
    %c-16_i32 = arith.constant -16 : i32
    %38 = vector.broadcast %c-16_i32 : i32 to vector<1x1x256xi32>
    %39 = arith.addi %0, %38 : vector<1x1x256xi32>
    %c0_i32_8 = arith.constant 0 : i32
    %40 = vector.broadcast %c0_i32_8 : i32 to vector<1x1x256xi32>
    %41 = arith.cmpi sge, %39, %40 : vector<1x1x256xi32>
    %c-16_i32_9 = arith.constant -16 : i32
    %42 = vector.broadcast %c-16_i32_9 : i32 to vector<1x1x256xi32>
    %43 = arith.addi %0, %42 : vector<1x1x256xi32>
    %c256_i32_10 = arith.constant 256 : i32
    %44 = vector.broadcast %c256_i32_10 : i32 to vector<1x1x256xi32>
    %45 = arith.cmpi slt, %43, %44 : vector<1x1x256xi32>
    %46 = arith.andi %41, %45 : vector<1x1x256xi1>
    %c0_i32_11 = arith.constant 0 : i32
    %47 = vector.broadcast %c0_i32_11 : i32 to vector<1x1x256xi32>
    %48 = arith.addi %16, %47 : vector<1x1x256xi32>
    %c0_i32_12 = arith.constant 0 : i32
    %49 = vector.broadcast %c0_i32_12 : i32 to vector<1x1x256xi32>
    %50 = arith.cmpi sge, %48, %49 : vector<1x1x256xi32>
    %51 = arith.andi %46, %50 : vector<1x1x256xi1>
    %c0_i32_13 = arith.constant 0 : i32
    %52 = vector.broadcast %c0_i32_13 : i32 to vector<1x1x256xi32>
    %53 = arith.addi %16, %52 : vector<1x1x256xi32>
    %c16_i32_14 = arith.constant 16 : i32
    %54 = vector.broadcast %c16_i32_14 : i32 to vector<1x1x256xi32>
    %55 = arith.cmpi slt, %53, %54 : vector<1x1x256xi32>
    %56 = arith.andi %51, %55 : vector<1x1x256xi1>
    %57 = arith.extui %56 : vector<1x1x256xi1> to vector<1x1x256xi32>
    %58 = arith.sitofp %57 : vector<1x1x256xi32> to vector<1x1x256xf32>
    %c-15_i32 = arith.constant -15 : i32
    %59 = vector.broadcast %c-15_i32 : i32 to vector<1x1x256xi32>
    %60 = arith.addi %0, %59 : vector<1x1x256xi32>
    %c0_i32_15 = arith.constant 0 : i32
    %61 = vector.broadcast %c0_i32_15 : i32 to vector<1x1x256xi32>
    %62 = arith.cmpi sge, %60, %61 : vector<1x1x256xi32>
    %c-15_i32_16 = arith.constant -15 : i32
    %63 = vector.broadcast %c-15_i32_16 : i32 to vector<1x1x256xi32>
    %64 = arith.addi %0, %63 : vector<1x1x256xi32>
    %c256_i32_17 = arith.constant 256 : i32
    %65 = vector.broadcast %c256_i32_17 : i32 to vector<1x1x256xi32>
    %66 = arith.cmpi slt, %64, %65 : vector<1x1x256xi32>
    %67 = arith.andi %62, %66 : vector<1x1x256xi1>
    %c1_i32_18 = arith.constant 1 : i32
    %68 = vector.broadcast %c1_i32_18 : i32 to vector<1x1x256xi32>
    %69 = arith.addi %16, %68 : vector<1x1x256xi32>
    %c0_i32_19 = arith.constant 0 : i32
    %70 = vector.broadcast %c0_i32_19 : i32 to vector<1x1x256xi32>
    %71 = arith.cmpi sge, %69, %70 : vector<1x1x256xi32>
    %72 = arith.andi %67, %71 : vector<1x1x256xi1>
    %c1_i32_20 = arith.constant 1 : i32
    %73 = vector.broadcast %c1_i32_20 : i32 to vector<1x1x256xi32>
    %74 = arith.addi %16, %73 : vector<1x1x256xi32>
    %c16_i32_21 = arith.constant 16 : i32
    %75 = vector.broadcast %c16_i32_21 : i32 to vector<1x1x256xi32>
    %76 = arith.cmpi slt, %74, %75 : vector<1x1x256xi32>
    %77 = arith.andi %72, %76 : vector<1x1x256xi1>
    %78 = arith.extui %77 : vector<1x1x256xi1> to vector<1x1x256xi32>
    %79 = arith.sitofp %78 : vector<1x1x256xi32> to vector<1x1x256xf32>
    %c-1_i32_22 = arith.constant -1 : i32
    %80 = vector.broadcast %c-1_i32_22 : i32 to vector<1x1x256xi32>
    %81 = arith.addi %0, %80 : vector<1x1x256xi32>
    %c0_i32_23 = arith.constant 0 : i32
    %82 = vector.broadcast %c0_i32_23 : i32 to vector<1x1x256xi32>
    %83 = arith.cmpi sge, %81, %82 : vector<1x1x256xi32>
    %c-1_i32_24 = arith.constant -1 : i32
    %84 = vector.broadcast %c-1_i32_24 : i32 to vector<1x1x256xi32>
    %85 = arith.addi %0, %84 : vector<1x1x256xi32>
    %c256_i32_25 = arith.constant 256 : i32
    %86 = vector.broadcast %c256_i32_25 : i32 to vector<1x1x256xi32>
    %87 = arith.cmpi slt, %85, %86 : vector<1x1x256xi32>
    %88 = arith.andi %83, %87 : vector<1x1x256xi1>
    %c-1_i32_26 = arith.constant -1 : i32
    %89 = vector.broadcast %c-1_i32_26 : i32 to vector<1x1x256xi32>
    %90 = arith.addi %16, %89 : vector<1x1x256xi32>
    %c0_i32_27 = arith.constant 0 : i32
    %91 = vector.broadcast %c0_i32_27 : i32 to vector<1x1x256xi32>
    %92 = arith.cmpi sge, %90, %91 : vector<1x1x256xi32>
    %93 = arith.andi %88, %92 : vector<1x1x256xi1>
    %c-1_i32_28 = arith.constant -1 : i32
    %94 = vector.broadcast %c-1_i32_28 : i32 to vector<1x1x256xi32>
    %95 = arith.addi %16, %94 : vector<1x1x256xi32>
    %c16_i32_29 = arith.constant 16 : i32
    %96 = vector.broadcast %c16_i32_29 : i32 to vector<1x1x256xi32>
    %97 = arith.cmpi slt, %95, %96 : vector<1x1x256xi32>
    %98 = arith.andi %93, %97 : vector<1x1x256xi1>
    %99 = arith.extui %98 : vector<1x1x256xi1> to vector<1x1x256xi32>
    %100 = arith.sitofp %99 : vector<1x1x256xi32> to vector<1x1x256xf32>
    %c1_i32_30 = arith.constant 1 : i32
    %101 = vector.broadcast %c1_i32_30 : i32 to vector<1x1x256xi32>
    %102 = arith.addi %0, %101 : vector<1x1x256xi32>
    %c0_i32_31 = arith.constant 0 : i32
    %103 = vector.broadcast %c0_i32_31 : i32 to vector<1x1x256xi32>
    %104 = arith.cmpi sge, %102, %103 : vector<1x1x256xi32>
    %c1_i32_32 = arith.constant 1 : i32
    %105 = vector.broadcast %c1_i32_32 : i32 to vector<1x1x256xi32>
    %106 = arith.addi %0, %105 : vector<1x1x256xi32>
    %c256_i32_33 = arith.constant 256 : i32
    %107 = vector.broadcast %c256_i32_33 : i32 to vector<1x1x256xi32>
    %108 = arith.cmpi slt, %106, %107 : vector<1x1x256xi32>
    %109 = arith.andi %104, %108 : vector<1x1x256xi1>
    %c1_i32_34 = arith.constant 1 : i32
    %110 = vector.broadcast %c1_i32_34 : i32 to vector<1x1x256xi32>
    %111 = arith.addi %16, %110 : vector<1x1x256xi32>
    %c0_i32_35 = arith.constant 0 : i32
    %112 = vector.broadcast %c0_i32_35 : i32 to vector<1x1x256xi32>
    %113 = arith.cmpi sge, %111, %112 : vector<1x1x256xi32>
    %114 = arith.andi %109, %113 : vector<1x1x256xi1>
    %c1_i32_36 = arith.constant 1 : i32
    %115 = vector.broadcast %c1_i32_36 : i32 to vector<1x1x256xi32>
    %116 = arith.addi %16, %115 : vector<1x1x256xi32>
    %c16_i32_37 = arith.constant 16 : i32
    %117 = vector.broadcast %c16_i32_37 : i32 to vector<1x1x256xi32>
    %118 = arith.cmpi slt, %116, %117 : vector<1x1x256xi32>
    %119 = arith.andi %114, %118 : vector<1x1x256xi1>
    %120 = arith.extui %119 : vector<1x1x256xi1> to vector<1x1x256xi32>
    %121 = arith.sitofp %120 : vector<1x1x256xi32> to vector<1x1x256xf32>
    %c15_i32 = arith.constant 15 : i32
    %122 = vector.broadcast %c15_i32 : i32 to vector<1x1x256xi32>
    %123 = arith.addi %0, %122 : vector<1x1x256xi32>
    %c0_i32_38 = arith.constant 0 : i32
    %124 = vector.broadcast %c0_i32_38 : i32 to vector<1x1x256xi32>
    %125 = arith.cmpi sge, %123, %124 : vector<1x1x256xi32>
    %c15_i32_39 = arith.constant 15 : i32
    %126 = vector.broadcast %c15_i32_39 : i32 to vector<1x1x256xi32>
    %127 = arith.addi %0, %126 : vector<1x1x256xi32>
    %c256_i32_40 = arith.constant 256 : i32
    %128 = vector.broadcast %c256_i32_40 : i32 to vector<1x1x256xi32>
    %129 = arith.cmpi slt, %127, %128 : vector<1x1x256xi32>
    %130 = arith.andi %125, %129 : vector<1x1x256xi1>
    %c-1_i32_41 = arith.constant -1 : i32
    %131 = vector.broadcast %c-1_i32_41 : i32 to vector<1x1x256xi32>
    %132 = arith.addi %16, %131 : vector<1x1x256xi32>
    %c0_i32_42 = arith.constant 0 : i32
    %133 = vector.broadcast %c0_i32_42 : i32 to vector<1x1x256xi32>
    %134 = arith.cmpi sge, %132, %133 : vector<1x1x256xi32>
    %135 = arith.andi %130, %134 : vector<1x1x256xi1>
    %c-1_i32_43 = arith.constant -1 : i32
    %136 = vector.broadcast %c-1_i32_43 : i32 to vector<1x1x256xi32>
    %137 = arith.addi %16, %136 : vector<1x1x256xi32>
    %c16_i32_44 = arith.constant 16 : i32
    %138 = vector.broadcast %c16_i32_44 : i32 to vector<1x1x256xi32>
    %139 = arith.cmpi slt, %137, %138 : vector<1x1x256xi32>
    %140 = arith.andi %135, %139 : vector<1x1x256xi1>
    %141 = arith.extui %140 : vector<1x1x256xi1> to vector<1x1x256xi32>
    %142 = arith.sitofp %141 : vector<1x1x256xi32> to vector<1x1x256xf32>
    %c16_i32_45 = arith.constant 16 : i32
    %143 = vector.broadcast %c16_i32_45 : i32 to vector<1x1x256xi32>
    %144 = arith.addi %0, %143 : vector<1x1x256xi32>
    %c0_i32_46 = arith.constant 0 : i32
    %145 = vector.broadcast %c0_i32_46 : i32 to vector<1x1x256xi32>
    %146 = arith.cmpi sge, %144, %145 : vector<1x1x256xi32>
    %c16_i32_47 = arith.constant 16 : i32
    %147 = vector.broadcast %c16_i32_47 : i32 to vector<1x1x256xi32>
    %148 = arith.addi %0, %147 : vector<1x1x256xi32>
    %c256_i32_48 = arith.constant 256 : i32
    %149 = vector.broadcast %c256_i32_48 : i32 to vector<1x1x256xi32>
    %150 = arith.cmpi slt, %148, %149 : vector<1x1x256xi32>
    %151 = arith.andi %146, %150 : vector<1x1x256xi1>
    %c0_i32_49 = arith.constant 0 : i32
    %152 = vector.broadcast %c0_i32_49 : i32 to vector<1x1x256xi32>
    %153 = arith.addi %16, %152 : vector<1x1x256xi32>
    %c0_i32_50 = arith.constant 0 : i32
    %154 = vector.broadcast %c0_i32_50 : i32 to vector<1x1x256xi32>
    %155 = arith.cmpi sge, %153, %154 : vector<1x1x256xi32>
    %156 = arith.andi %151, %155 : vector<1x1x256xi1>
    %c0_i32_51 = arith.constant 0 : i32
    %157 = vector.broadcast %c0_i32_51 : i32 to vector<1x1x256xi32>
    %158 = arith.addi %16, %157 : vector<1x1x256xi32>
    %c16_i32_52 = arith.constant 16 : i32
    %159 = vector.broadcast %c16_i32_52 : i32 to vector<1x1x256xi32>
    %160 = arith.cmpi slt, %158, %159 : vector<1x1x256xi32>
    %161 = arith.andi %156, %160 : vector<1x1x256xi1>
    %162 = arith.extui %161 : vector<1x1x256xi1> to vector<1x1x256xi32>
    %163 = arith.sitofp %162 : vector<1x1x256xi32> to vector<1x1x256xf32>
    %c17_i32 = arith.constant 17 : i32
    %164 = vector.broadcast %c17_i32 : i32 to vector<1x1x256xi32>
    %165 = arith.addi %0, %164 : vector<1x1x256xi32>
    %c0_i32_53 = arith.constant 0 : i32
    %166 = vector.broadcast %c0_i32_53 : i32 to vector<1x1x256xi32>
    %167 = arith.cmpi sge, %165, %166 : vector<1x1x256xi32>
    %c17_i32_54 = arith.constant 17 : i32
    %168 = vector.broadcast %c17_i32_54 : i32 to vector<1x1x256xi32>
    %169 = arith.addi %0, %168 : vector<1x1x256xi32>
    %c256_i32_55 = arith.constant 256 : i32
    %170 = vector.broadcast %c256_i32_55 : i32 to vector<1x1x256xi32>
    %171 = arith.cmpi slt, %169, %170 : vector<1x1x256xi32>
    %172 = arith.andi %167, %171 : vector<1x1x256xi1>
    %c1_i32_56 = arith.constant 1 : i32
    %173 = vector.broadcast %c1_i32_56 : i32 to vector<1x1x256xi32>
    %174 = arith.addi %16, %173 : vector<1x1x256xi32>
    %c0_i32_57 = arith.constant 0 : i32
    %175 = vector.broadcast %c0_i32_57 : i32 to vector<1x1x256xi32>
    %176 = arith.cmpi sge, %174, %175 : vector<1x1x256xi32>
    %177 = arith.andi %172, %176 : vector<1x1x256xi1>
    %c1_i32_58 = arith.constant 1 : i32
    %178 = vector.broadcast %c1_i32_58 : i32 to vector<1x1x256xi32>
    %179 = arith.addi %16, %178 : vector<1x1x256xi32>
    %c16_i32_59 = arith.constant 16 : i32
    %180 = vector.broadcast %c16_i32_59 : i32 to vector<1x1x256xi32>
    %181 = arith.cmpi slt, %179, %180 : vector<1x1x256xi32>
    %182 = arith.andi %177, %181 : vector<1x1x256xi1>
    %183 = arith.extui %182 : vector<1x1x256xi1> to vector<1x1x256xi32>
    %184 = arith.sitofp %183 : vector<1x1x256xi32> to vector<1x1x256xf32>
    %c0 = arith.constant 0 : index
    %c0_60 = arith.constant 0 : index
    %c0_61 = arith.constant 0 : index
    %185 = vector.load %arg1[%c0, %c0_60, %c0_61] : memref<1x8x256xf32, #tpu.memory_space<vmem>>, vector<1x8x256xf32>
    %c0_62 = arith.constant 0 : index
    %c0_63 = arith.constant 0 : index
    %186 = vector.load %arg2[%c0_62, %c0_63] : memref<8x72xf32, #tpu.memory_space<vmem>>, vector<8x72xf32>
    %187 = vector.shape_cast %186 : vector<8x72xf32> to vector<1x8x72xf32>
    %c0_64 = arith.constant 0 : index
    %c0_65 = arith.constant 0 : index
    %188 = vector.load %arg4[%c0_64, %c0_65] : memref<8x72xf32, #tpu.memory_space<vmem>>, vector<8x72xf32>
    %189 = vector.shape_cast %188 : vector<8x72xf32> to vector<1x8x72xf32>
    %c0_66 = arith.constant 0 : index
    %c0_67 = arith.constant 0 : index
    %190 = vector.load %arg3[%c0_66, %c0_67] : memref<8x1xf32, #tpu.memory_space<vmem>>, vector<8x1xf32>
    %191 = vector.shape_cast %190 : vector<8x1xf32> to vector<1x8x1xf32>
    %c0_68 = arith.constant 0 : index
    %c0_69 = arith.constant 0 : index
    %192 = vector.load %arg5[%c0_68, %c0_69] : memref<8x1xf32, #tpu.memory_space<vmem>>, vector<8x1xf32>
    %193 = vector.shape_cast %192 : vector<8x1xf32> to vector<1x8x1xf32>
    %c0_70 = arith.constant 0 : index
    %c0_71 = arith.constant 0 : index
    %194 = vector.load %arg6[%c0_70, %c0_71] : memref<8x1xf32, #tpu.memory_space<vmem>>, vector<8x1xf32>
    %195 = vector.shape_cast %194 : vector<8x1xf32> to vector<1x8x1xf32>
    %c17_i32_72 = arith.constant 17 : i32
    %196 = tpu.dynamic_rotate %185 by %c17_i32_72 dim 2 : vector<1x8x256xf32>, i32 -> vector<1x8x256xf32>
    %197 = vector.broadcast %37 : vector<1x1x256xf32> to vector<1x8x256xf32>
    %198 = arith.mulf %196, %197 : vector<1x8x256xf32>
    %c16_i32_73 = arith.constant 16 : i32
    %199 = tpu.dynamic_rotate %185 by %c16_i32_73 dim 2 : vector<1x8x256xf32>, i32 -> vector<1x8x256xf32>
    %200 = vector.broadcast %58 : vector<1x1x256xf32> to vector<1x8x256xf32>
    %201 = arith.mulf %199, %200 : vector<1x8x256xf32>
    %c15_i32_74 = arith.constant 15 : i32
    %202 = tpu.dynamic_rotate %185 by %c15_i32_74 dim 2 : vector<1x8x256xf32>, i32 -> vector<1x8x256xf32>
    %203 = vector.broadcast %79 : vector<1x1x256xf32> to vector<1x8x256xf32>
    %204 = arith.mulf %202, %203 : vector<1x8x256xf32>
    %c1_i32_75 = arith.constant 1 : i32
    %205 = tpu.dynamic_rotate %185 by %c1_i32_75 dim 2 : vector<1x8x256xf32>, i32 -> vector<1x8x256xf32>
    %206 = vector.broadcast %100 : vector<1x1x256xf32> to vector<1x8x256xf32>
    %207 = arith.mulf %205, %206 : vector<1x8x256xf32>
    %c255_i32 = arith.constant 255 : i32
    %208 = tpu.dynamic_rotate %185 by %c255_i32 dim 2 : vector<1x8x256xf32>, i32 -> vector<1x8x256xf32>
    %209 = vector.broadcast %121 : vector<1x1x256xf32> to vector<1x8x256xf32>
    %210 = arith.mulf %208, %209 : vector<1x8x256xf32>
    %c241_i32 = arith.constant 241 : i32
    %211 = tpu.dynamic_rotate %185 by %c241_i32 dim 2 : vector<1x8x256xf32>, i32 -> vector<1x8x256xf32>
    %212 = vector.broadcast %142 : vector<1x1x256xf32> to vector<1x8x256xf32>
    %213 = arith.mulf %211, %212 : vector<1x8x256xf32>
    %c240_i32 = arith.constant 240 : i32
    %214 = tpu.dynamic_rotate %185 by %c240_i32 dim 2 : vector<1x8x256xf32>, i32 -> vector<1x8x256xf32>
    %215 = vector.broadcast %163 : vector<1x1x256xf32> to vector<1x8x256xf32>
    %216 = arith.mulf %214, %215 : vector<1x8x256xf32>
    %c239_i32 = arith.constant 239 : i32
    %217 = tpu.dynamic_rotate %185 by %c239_i32 dim 2 : vector<1x8x256xf32>, i32 -> vector<1x8x256xf32>
    %218 = vector.broadcast %184 : vector<1x1x256xf32> to vector<1x8x256xf32>
    %219 = arith.mulf %217, %218 : vector<1x8x256xf32>
    %220 = tpu.concatenate %198, %201, %204, %207, %185, %210, %213, %216, %219 in 1 : vector<1x8x256xf32>, vector<1x8x256xf32>, vector<1x8x256xf32>, vector<1x8x256xf32>, vector<1x8x256xf32>, vector<1x8x256xf32>, vector<1x8x256xf32>, vector<1x8x256xf32>, vector<1x8x256xf32> -> vector<1x72x256xf32>
    "tpu.trace_start"() <{level = 10 : i32, message = "bok,bkp->bop"}> : () -> ()
    %cst = arith.constant dense<0.000000e+00> : vector<1x8x256xf32>
    %221 = tpu.matmul %187, %220, %cst {dimension_numbers = #tpu.dot_dimension_numbers<[2], [1], [1], [2], [0, 0, 0, 1, 1, 2], [0], [0]>} : vector<1x8x72xf32>, vector<1x72x256xf32>, vector<1x8x256xf32> -> vector<1x8x256xf32>
    "tpu.trace_stop"() : () -> ()
    %222 = vector.broadcast %191 : vector<1x8x1xf32> to vector<1x8x256xf32>
    %223 = arith.addf %221, %222 : vector<1x8x256xf32>
    %cst_76 = arith.constant 0.000000e+00 : f32
    %224 = vector.broadcast %cst_76 : f32 to vector<1x8x256xf32>
    %225 = arith.cmpf ogt, %223, %224 : vector<1x8x256xf32>
    %226 = vector.broadcast %195 : vector<1x8x1xf32> to vector<1x8x256xf32>
    %227 = arith.mulf %226, %223 : vector<1x8x256xf32>
    %228 = arith.select %225, %223, %227 : vector<1x8x256xi1>, vector<1x8x256xf32>
    %c17_i32_77 = arith.constant 17 : i32
    %229 = tpu.dynamic_rotate %228 by %c17_i32_77 dim 2 : vector<1x8x256xf32>, i32 -> vector<1x8x256xf32>
    %230 = vector.broadcast %37 : vector<1x1x256xf32> to vector<1x8x256xf32>
    %231 = arith.mulf %229, %230 : vector<1x8x256xf32>
    %c16_i32_78 = arith.constant 16 : i32
    %232 = tpu.dynamic_rotate %228 by %c16_i32_78 dim 2 : vector<1x8x256xf32>, i32 -> vector<1x8x256xf32>
    %233 = vector.broadcast %58 : vector<1x1x256xf32> to vector<1x8x256xf32>
    %234 = arith.mulf %232, %233 : vector<1x8x256xf32>
    %c15_i32_79 = arith.constant 15 : i32
    %235 = tpu.dynamic_rotate %228 by %c15_i32_79 dim 2 : vector<1x8x256xf32>, i32 -> vector<1x8x256xf32>
    %236 = vector.broadcast %79 : vector<1x1x256xf32> to vector<1x8x256xf32>
    %237 = arith.mulf %235, %236 : vector<1x8x256xf32>
    %c1_i32_80 = arith.constant 1 : i32
    %238 = tpu.dynamic_rotate %228 by %c1_i32_80 dim 2 : vector<1x8x256xf32>, i32 -> vector<1x8x256xf32>
    %239 = vector.broadcast %100 : vector<1x1x256xf32> to vector<1x8x256xf32>
    %240 = arith.mulf %238, %239 : vector<1x8x256xf32>
    %c255_i32_81 = arith.constant 255 : i32
    %241 = tpu.dynamic_rotate %228 by %c255_i32_81 dim 2 : vector<1x8x256xf32>, i32 -> vector<1x8x256xf32>
    %242 = vector.broadcast %121 : vector<1x1x256xf32> to vector<1x8x256xf32>
    %243 = arith.mulf %241, %242 : vector<1x8x256xf32>
    %c241_i32_82 = arith.constant 241 : i32
    %244 = tpu.dynamic_rotate %228 by %c241_i32_82 dim 2 : vector<1x8x256xf32>, i32 -> vector<1x8x256xf32>
    %245 = vector.broadcast %142 : vector<1x1x256xf32> to vector<1x8x256xf32>
    %246 = arith.mulf %244, %245 : vector<1x8x256xf32>
    %c240_i32_83 = arith.constant 240 : i32
    %247 = tpu.dynamic_rotate %228 by %c240_i32_83 dim 2 : vector<1x8x256xf32>, i32 -> vector<1x8x256xf32>
    %248 = vector.broadcast %163 : vector<1x1x256xf32> to vector<1x8x256xf32>
    %249 = arith.mulf %247, %248 : vector<1x8x256xf32>
    %c239_i32_84 = arith.constant 239 : i32
    %250 = tpu.dynamic_rotate %228 by %c239_i32_84 dim 2 : vector<1x8x256xf32>, i32 -> vector<1x8x256xf32>
    %251 = vector.broadcast %184 : vector<1x1x256xf32> to vector<1x8x256xf32>
    %252 = arith.mulf %250, %251 : vector<1x8x256xf32>
    %253 = tpu.concatenate %231, %234, %237, %240, %228, %243, %246, %249, %252 in 1 : vector<1x8x256xf32>, vector<1x8x256xf32>, vector<1x8x256xf32>, vector<1x8x256xf32>, vector<1x8x256xf32>, vector<1x8x256xf32>, vector<1x8x256xf32>, vector<1x8x256xf32>, vector<1x8x256xf32> -> vector<1x72x256xf32>
    "tpu.trace_start"() <{level = 10 : i32, message = "bok,bkp->bop"}> : () -> ()
    %cst_85 = arith.constant dense<0.000000e+00> : vector<1x8x256xf32>
    %254 = tpu.matmul %189, %253, %cst_85 {dimension_numbers = #tpu.dot_dimension_numbers<[2], [1], [1], [2], [0, 0, 0, 1, 1, 2], [0], [0]>} : vector<1x8x72xf32>, vector<1x72x256xf32>, vector<1x8x256xf32> -> vector<1x8x256xf32>
    "tpu.trace_stop"() : () -> ()
    %255 = vector.broadcast %193 : vector<1x8x1xf32> to vector<1x8x256xf32>
    %256 = arith.addf %254, %255 : vector<1x8x256xf32>
    %cst_86 = arith.constant 1.000000e+00 : f32
    %257 = vector.broadcast %cst_86 : f32 to vector<1x8x256xf32>
    %258 = arith.mulf %256, %257 : vector<1x8x256xf32>
    %259 = arith.addf %258, %185 : vector<1x8x256xf32>
    %c0_87 = arith.constant 0 : index
    %c0_88 = arith.constant 0 : index
    %c0_89 = arith.constant 0 : index
    %260 = vector.load %arg7[%c0_87, %c0_88, %c0_89] : memref<1x8x256xf32, #tpu.memory_space<vmem>>, vector<1x8x256xf32>
    tpu.vector_store %arg7[%c0_87, %c0_88, %c0_89], %259 {strides = array<i32>} : memref<1x8x256xf32, #tpu.memory_space<vmem>>, vector<1x8x256xf32>,
    return
  }
  func.func @transform_0(%arg0: i32) -> (i32, i32, i32) {
    %c0_i32 = arith.constant 0 : i32
    %c0_i32_0 = arith.constant 0 : i32
    %c0_i32_1 = arith.constant 0 : i32
    return %arg0, %c0_i32, %c0_i32_0 : i32, i32, i32
  }
  func.func @transform_1(%arg0: i32) -> (i32, i32) {
    %c0_i32 = arith.constant 0 : i32
    %c0_i32_0 = arith.constant 0 : i32
    %c0_i32_1 = arith.constant 0 : i32
    return %c0_i32, %c0_i32_0 : i32, i32
  }
  func.func @transform_2(%arg0: i32) -> (i32, i32) {
    %c0_i32 = arith.constant 0 : i32
    %c0_i32_0 = arith.constant 0 : i32
    %c0_i32_1 = arith.constant 0 : i32
    return %c0_i32, %c0_i32_0 : i32, i32
  }
  func.func @transform_3(%arg0: i32) -> (i32, i32) {
    %c0_i32 = arith.constant 0 : i32
    %c0_i32_0 = arith.constant 0 : i32
    %c0_i32_1 = arith.constant 0 : i32
    return %c0_i32, %c0_i32_0 : i32, i32
  }
  func.func @transform_4(%arg0: i32) -> (i32, i32) {
    %c0_i32 = arith.constant 0 : i32
    %c0_i32_0 = arith.constant 0 : i32
    %c0_i32_1 = arith.constant 0 : i32
    return %c0_i32, %c0_i32_0 : i32, i32
  }
  func.func @transform_5(%arg0: i32) -> (i32, i32) {
    %c0_i32 = arith.constant 0 : i32
    %c0_i32_0 = arith.constant 0 : i32
    %c0_i32_1 = arith.constant 0 : i32
    return %c0_i32, %c0_i32_0 : i32, i32
  }
  func.func @transform_6(%arg0: i32) -> (i32, i32, i32) {
    %c0_i32 = arith.constant 0 : i32
    %c0_i32_0 = arith.constant 0 : i32
    %c0_i32_1 = arith.constant 0 : i32
    return %arg0, %c0_i32, %c0_i32_0 : i32, i32, i32
  }
}

</mosaic_0001>

<llo_original>
// kernel: tpu_custom_call.1
$region0: #{tpu_custom_call.1}
  #allocation0 [shape = 'u32[]', space=smem, size = 0x4, offset = 0x4, fixed_abs, tag = 'smem constant byte address 0x4 - core index']
  #allocation1 [shape = 'u32[144,128]{1,0:T(1,128)}', space=vmem, size = 0x12000, scoped, tag = 'internal scratch']
  %s0 = inlined_call_operand.hbm [shape: f32[2,8,256], index: 0, kind: input, shape index: {}]
  %s1 = inlined_call_operand.vmem [shape: f32[8,72], index: 1, kind: input, shape index: {}]
  %s2 = inlined_call_operand.vmem [shape: f32[8,1], index: 2, kind: input, shape index: {}]
  %s3 = inlined_call_operand.vmem [shape: f32[8,72], index: 3, kind: input, shape index: {}]
  %s4 = inlined_call_operand.vmem [shape: f32[8,1], index: 4, kind: input, shape index: {}]
  %s5 = inlined_call_operand.vmem [shape: f32[8,1], index: 5, kind: input, shape index: {}]
  %s6 = inlined_call_operand.hbm [shape: f32[2,8,256], index: 6, kind: output, shape index: {}]
  %s7 = sld [smem:[#allocation0]]
  $region61: #{tpu_custom_call.1} parent=0
    _
  %s9 = ssub.s32 1, %s7
  %s10 = scalar_select 0, %s9, %s7
  $region1: #{tpu_custom_call.1} parent=0
    #allocation2 [shape = 'u8[16384]{0}', space=vmem, size = 0x4000, scoped, tag = 'input window, operand 0']
    #allocation3 [shape = 's32[2]{0}', space=sflag, size = 0x8, scoped, tag = 'scoped memory for tpu_custom_call.1']
    #allocation4 [shape = 's32[2]{0}', space=sflag, size = 0x8, scoped, tag = 'scoped memory for tpu_custom_call.1']
    #allocation5 [shape = 'u8[16384]{0}', space=vmem, size = 0x4000, scoped, tag = 'output window, operand 0']
    %11 = vsyncpa [#allocation3], 0
    %s12 = scalar_lea.sflag [#allocation3], 1
    %13 = vsyncpa %s12, 0
    %14 = vsyncpa [#allocation4], 0
    %s15 = scalar_lea.sflag [#allocation4], 1
    %16 = vsyncpa %s15, 0
    loop: start=0, step=1, limit=4
    $region2: #{tpu_custom_call.1} parent=1 // loop_pre_header
      _
    $region3: #{tpu_custom_call.1} parent=1 // loop_header
      %s18 = sphi 0, %s22
      %p19 = scmp.ge.s32.totalorder %s18, 4
      %s28 = sphi 0, %s30
      %s31 = sphi 0, %s28
      %s32 = sphi 0, %s31
      %s48 = sphi 0, %s32
      %s52 = sphi 0, %s52
      %s54 = sphi 0, %s52
      %s55 = sphi 0, %s54
      %s69 = sphi 0, %s55
      %s73 = sphi 0, %s73
      %s75 = sphi 0, %s73
      %s76 = sphi 0, %s75
      %s90 = sphi 0, %s76
      %s94 = sphi 0, %s94
      %s96 = sphi 0, %s94
      %s97 = sphi 0, %s96
      %s111 = sphi 0, %s97
      %s115 = sphi 0, %s115
      %s117 = sphi 0, %s115
      %s118 = sphi 0, %s117
      %s132 = sphi 0, %s118
      %s136 = sphi 0, %s136
      %s138 = sphi 0, %s136
      %s139 = sphi 0, %s138
      %s153 = sphi 0, %s139
      %s159 = sphi 0, %s161
      %s162 = sphi 0, %s159
      %s163 = sphi 0, %s162
      %s179 = sphi 0, %s163
    $region4: #{tpu_custom_call.1} parent=1 // loop_header_branch
      %21 = sbr.rel (%p19) target = $region8
    $region5: #{tpu_custom_call.1} parent=1 // loop_body
      %s23 = ssub.s32 %s18, 1
      %s24 = ssub.s32 %s18, 2
      %s25 = sadd.s32 %s18, 1
      %s26 = ssub.s32 %s18, %s25
      %p27 = scmp.eq.s32.totalorder %s26, 0
      %s29 = sadd.s32 %s28, 1
      %s30 = scalar_select %p27, %s28, %s29
      %p33 = pneg %p27
      %p34 = scmp.eq.s32.totalorder %s18, 1
      %p35 = por %p33, %p34
      %p36 = scmp.ne.s32.totalorder %s28, %s31
      %p37 = scmp.eq.s32.totalorder %s18, 0
      %p38 = por %p36, %p37
      %p39 = scmp.ne.s32.totalorder %s28, %s31
      %p40 = scmp.eq.s32.totalorder %s23, 1
      %p41 = por %p39, %p40
      %p42 = scmp.ne.s32.totalorder %s31, %s32
      %p43 = scmp.eq.s32.totalorder %s23, 0
      %p44 = por %p42, %p43
      %p45 = scmp.ne.s32.totalorder %s31, %s32
      %p46 = scmp.eq.s32.totalorder %s24, 1
      %p47 = por %p45, %p46
      %p49 = scmp.ne.s32.totalorder %s32, %s48
      %p50 = scmp.eq.s32.totalorder %s24, 0
      %p51 = por %p49, %p50
      %s53 = sadd.s32 %s52, 1
      %p56 = scmp.eq.s32.totalorder %s18, 1
      %p57 = scmp.ne.s32.totalorder %s52, %s54
      %p58 = scmp.eq.s32.totalorder %s18, 0
      %p59 = por %p57, %p58
      %p60 = scmp.ne.s32.totalorder %s52, %s54
      %p61 = scmp.eq.s32.totalorder %s23, 1
      %p62 = por %p60, %p61
      %p63 = scmp.ne.s32.totalorder %s54, %s55
      %p64 = scmp.eq.s32.totalorder %s23, 0
      %p65 = por %p63, %p64
      %p66 = scmp.ne.s32.totalorder %s54, %s55
      %p67 = scmp.eq.s32.totalorder %s24, 1
      %p68 = por %p66, %p67
      %p70 = scmp.ne.s32.totalorder %s55, %s69
      %p71 = scmp.eq.s32.totalorder %s24, 0
      %p72 = por %p70, %p71
      %s74 = sadd.s32 %s73, 1
      %p77 = scmp.eq.s32.totalorder %s18, 1
      %p78 = scmp.ne.s32.totalorder %s73, %s75
      %p79 = scmp.eq.s32.totalorder %s18, 0
      %p80 = por %p78, %p79
      %p81 = scmp.ne.s32.totalorder %s73, %s75
      %p82 = scmp.eq.s32.totalorder %s23, 1
      %p83 = por %p81, %p82
      %p84 = scmp.ne.s32.totalorder %s75, %s76
      %p85 = scmp.eq.s32.totalorder %s23, 0
      %p86 = por %p84, %p85
      %p87 = scmp.ne.s32.totalorder %s75, %s76
      %p88 = scmp.eq.s32.totalorder %s24, 1
      %p89 = por %p87, %p88
      %p91 = scmp.ne.s32.totalorder %s76, %s90
      %p92 = scmp.eq.s32.totalorder %s24, 0
      %p93 = por %p91, %p92
      %s95 = sadd.s32 %s94, 1
      %p98 = scmp.eq.s32.totalorder %s18, 1
      %p99 = scmp.ne.s32.totalorder %s94, %s96
      %p100 = scmp.eq.s32.totalorder %s18, 0
      %p101 = por %p99, %p100
      %p102 = scmp.ne.s32.totalorder %s94, %s96
      %p103 = scmp.eq.s32.totalorder %s23, 1
      %p104 = por %p102, %p103
      %p105 = scmp.ne.s32.totalorder %s96, %s97
      %p106 = scmp.eq.s32.totalorder %s23, 0
      %p107 = por %p105, %p106
      %p108 = scmp.ne.s32.totalorder %s96, %s97
      %p109 = scmp.eq.s32.totalorder %s24, 1
      %p110 = por %p108, %p109
      %p112 = scmp.ne.s32.totalorder %s97, %s111
      %p113 = scmp.eq.s32.totalorder %s24, 0
      %p114 = por %p112, %p113
      %s116 = sadd.s32 %s115, 1
      %p119 = scmp.eq.s32.totalorder %s18, 1
      %p120 = scmp.ne.s32.totalorder %s115, %s117
      %p121 = scmp.eq.s32.totalorder %s18, 0
      %p122 = por %p120, %p121
      %p123 = scmp.ne.s32.totalorder %s115, %s117
      %p124 = scmp.eq.s32.totalorder %s23, 1
      %p125 = por %p123, %p124
      %p126 = scmp.ne.s32.totalorder %s117, %s118
      %p127 = scmp.eq.s32.totalorder %s23, 0
      %p128 = por %p126, %p127
      %p129 = scmp.ne.s32.totalorder %s117, %s118
      %p130 = scmp.eq.s32.totalorder %s24, 1
      %p131 = por %p129, %p130
      %p133 = scmp.ne.s32.totalorder %s118, %s132
      %p134 = scmp.eq.s32.totalorder %s24, 0
      %p135 = por %p133, %p134
      %s137 = sadd.s32 %s136, 1
      %p140 = scmp.eq.s32.totalorder %s18, 1
      %p141 = scmp.ne.s32.totalorder %s136, %s138
      %p142 = scmp.eq.s32.totalorder %s18, 0
      %p143 = por %p141, %p142
      %p144 = scmp.ne.s32.totalorder %s136, %s138
      %p145 = scmp.eq.s32.totalorder %s23, 1
      %p146 = por %p144, %p145
      %p147 = scmp.ne.s32.totalorder %s138, %s139
      %p148 = scmp.eq.s32.totalorder %s23, 0
      %p149 = por %p147, %p148
      %p150 = scmp.ne.s32.totalorder %s138, %s139
      %p151 = scmp.eq.s32.totalorder %s24, 1
      %p152 = por %p150, %p151
      %p154 = scmp.ne.s32.totalorder %s139, %s153
      %p155 = scmp.eq.s32.totalorder %s24, 0
      %p156 = por %p154, %p155
      %s157 = ssub.s32 %s18, %s25
      %p158 = scmp.eq.s32.totalorder %s157, 0
      %s160 = sadd.s32 %s159, 1
      %s161 = scalar_select %p158, %s159, %s160
      %p164 = pneg %p158
      %p165 = scmp.eq.s32.totalorder %s18, 1
      %p166 = por %p164, %p165
      %p167 = scmp.ne.s32.totalorder %s159, %s162
      %p168 = scmp.eq.s32.totalorder %s18, 0
      %p169 = por %p167, %p168
      %p170 = scmp.ne.s32.totalorder %s159, %s162
      %p171 = scmp.eq.s32.totalorder %s23, 1
      %p172 = por %p170, %p171
      %p173 = scmp.ne.s32.totalorder %s162, %s163
      %p174 = scmp.eq.s32.totalorder %s23, 0
      %p175 = por %p173, %p174
      %p176 = scmp.ne.s32.totalorder %s162, %s163
      %p177 = scmp.eq.s32.totalorder %s24, 1
      %p178 = por %p176, %p177
      %p180 = scmp.ne.s32.totalorder %s163, %s179
      %p181 = scmp.eq.s32.totalorder %s24, 0
      %p182 = por %p180, %p181
      %p183 = scmp.le.s32.totalorder 1, %s18
      %p184 = scmp.lt.s32.totalorder %s18, 3
      %p185 = pnand %p183, %p184
      %p186 = pneg %p185
      // Predicated region
      $region9: #{tpu_custom_call.1} parent=5 // pred_check
        _
      $region10: #{tpu_custom_call.1} parent=5 // pred_check_branch
        %188 = sbr.rel (%p185) target = $region12
      $region11: #{tpu_custom_call.1} parent=5 // pred_region
        %s189 = ssub.s32 %s18, 1
        // Predicated region
        $region13: #{tpu_custom_call.1} parent=11 // pred_check
          %p190 = pneg %p65
        $region14: #{tpu_custom_call.1} parent=11 // pred_check_branch
          %192 = sbr.rel (%p190) target = $region16
        $region15: #{tpu_custom_call.1} parent=11 // pred_region
          _
        $region16: #{tpu_custom_call.1} parent=11 // pred_fallthru
          _
        // Predicated region
        $region17: #{tpu_custom_call.1} parent=11 // pred_check
          %p193 = pneg %p86
        $region18: #{tpu_custom_call.1} parent=11 // pred_check_branch
          %195 = sbr.rel (%p193) target = $region20
        $region19: #{tpu_custom_call.1} parent=11 // pred_region
          _
        $region20: #{tpu_custom_call.1} parent=11 // pred_fallthru
          _
        // Predicated region
        $region21: #{tpu_custom_call.1} parent=11 // pred_check
          %p196 = pneg %p107
        $region22: #{tpu_custom_call.1} parent=11 // pred_check_branch
          %198 = sbr.rel (%p196) target = $region24
        $region23: #{tpu_custom_call.1} parent=11 // pred_region
          _
        $region24: #{tpu_custom_call.1} parent=11 // pred_fallthru
          _
        // Predicated region
        $region25: #{tpu_custom_call.1} parent=11 // pred_check
          %p199 = pneg %p128
        $region26: #{tpu_custom_call.1} parent=11 // pred_check_branch
          %201 = sbr.rel (%p199) target = $region28
        $region27: #{tpu_custom_call.1} parent=11 // pred_region
          _
        $region28: #{tpu_custom_call.1} parent=11 // pred_fallthru
          _
        // Predicated region
        $region29: #{tpu_custom_call.1} parent=11 // pred_check
          %p202 = pneg %p149
        $region30: #{tpu_custom_call.1} parent=11 // pred_check_branch
          %204 = sbr.rel (%p202) target = $region32
        $region31: #{tpu_custom_call.1} parent=11 // pred_region
          _
        $region32: #{tpu_custom_call.1} parent=11 // pred_fallthru
          _
      $region12: #{tpu_custom_call.1} parent=5 // pred_fallthru
        _
      %p205 = scmp.lt.s32.totalorder %s18, 2
      // Predicated region
      $region33: #{tpu_custom_call.1} parent=5 // pred_check
        %p206 = pneg %p205
      $region34: #{tpu_custom_call.1} parent=5 // pred_check_branch
        %208 = sbr.rel (%p206) target = $region36
      $region35: #{tpu_custom_call.1} parent=5 // pred_region
        // Predicated region
        $region37: #{tpu_custom_call.1} parent=35 // pred_check
          %p209 = pneg %p38
        $region38: #{tpu_custom_call.1} parent=35 // pred_check_branch
          %211 = sbr.rel (%p209) target = $region40
        $region39: #{tpu_custom_call.1} parent=35 // pred_region
          %s212 = sand.u32 %s28, 1
          %s213 = scalar_lea.sflag [#allocation3], %s212
          %s214 = sand.u32 %s28, 1
          %s215 = smul.addr %s214, 16
          %s216 = scalar_lea.vmem [#allocation2], %s215
          %s218 = ssub.s32 256, 256
          %219 = vsyncadd %s213, %s218
          %s220 = smul.addr %s18, 2
          %s221 = smul.addr %s220, 128
          %s222 = scalar_lea.hbm %s0, %s221
          %s224 = sshll.u32 %s216, 4
          %s225 = int_to_ptr.vmem [resolvable:$true] %s224
          %227 = dma.hbm_to_vmem [thread:$0]  %s222, 256, %s225, %s213
        $region40: #{tpu_custom_call.1} parent=35 // pred_fallthru
          _
      $region36: #{tpu_custom_call.1} parent=5 // pred_fallthru
        _
      %p228 = scmp.le.s32.totalorder 1, %s18
      %p229 = scmp.lt.s32.totalorder %s18, 3
      %p230 = pnand %p228, %p229
      %p231 = pneg %p230
      // Predicated region
      $region41: #{tpu_custom_call.1} parent=5 // pred_check
        _
      $region42: #{tpu_custom_call.1} parent=5 // pred_check_branch
        %233 = sbr.rel (%p230) target = $region44
      $region43: #{tpu_custom_call.1} parent=5 // pred_region
        %s234 = ssub.s32 %s18, 1
        %s235 = sand.u32 %s31, 1
        %s236 = scalar_lea.sflag [#allocation3], %s235
        %s237 = sand.u32 %s31, 1
        %s238 = smul.addr %s237, 16
        %s239 = scalar_lea.vmem [#allocation2], %s238
        // Predicated region
        $region45: #{tpu_custom_call.1} parent=43 // pred_check
          %p240 = pneg %p44
        $region46: #{tpu_custom_call.1} parent=43 // pred_check_branch
          %242 = sbr.rel (%p240) target = $region48
        $region47: #{tpu_custom_call.1} parent=43 // pred_region
          %243 = dma.done %s236, 256
        $region48: #{tpu_custom_call.1} parent=43 // pred_fallthru
          _
        %s244 = sand.u32 %s31, 1
        %s245 = scalar_lea.sflag [#allocation3], %s244
        %s246 = sand.u32 %s31, 1
        %s247 = smul.addr %s246, 16
        %s248 = scalar_lea.vmem [#allocation2], %s247
        %p249 = pneg %p44
        %p250 = pneg %p41
        %p251 = pneg %p65
        %p252 = pneg %p62
        %p253 = pneg %p86
        %p254 = pneg %p83
        %p255 = pneg %p107
        %p256 = pneg %p104
        %p257 = pneg %p128
        %p258 = pneg %p125
        %p259 = pneg %p149
        %p260 = pneg %p146
        %p261 = pneg %p175
        %p262 = pneg %p172
        %s263 = sand.u32 %s162, 1
        %s264 = scalar_lea.sflag [#allocation4], %s263
        %s265 = sand.u32 %s162, 1
        %s266 = smul.addr %s265, 16
        %s267 = scalar_lea.vmem [#allocation5], %s266
        %v268 = vlaneseq
        %v269 = vand.u32 %v268, 127
        %v270 = vadd.s32 %v269, 128
        %vm271 = vcmp.lt.s32.totalorder %v269, 0
        %v272 = vsub.s32 0, %v269
        %v273 = vsel %vm271, %v272, %v269
        %v274 = vshrl.u32 %v273, 4
        %v275 = vand.u32 %v273, 15
        %v276 = vsub.s32 0, %v275
        %v277 = vsel %vm271, %v276, %v275
        %vm278 = vcmp.lt.s32.totalorder %v270, 0
        %v279 = vsub.s32 0, %v270
        %v280 = vsel %vm278, %v279, %v270
        %v281 = vshrl.u32 %v280, 4
        %v282 = vand.u32 %v280, 15
        %v283 = vsub.s32 0, %v282
        %v284 = vsel %vm278, %v283, %v282
        %vm285 = vcmp.ne.s32.totalorder %v277, 0
        %vm286 = vcmp.ne.s32.totalorder %v284, 0
        %vm287 = vcmp.lt.s32.totalorder %v277, 0
        %vm288 = vcmp.lt.s32.totalorder %v284, 0
        %vm289 = vmand %vm287, %vm285
        %vm290 = vmand %vm288, %vm286
        %v291 = vadd.s32 %v277, 16
        %v292 = vadd.s32 %v284, 16
        %v293 = vsel %vm289, %v291, %v277
        %v294 = vsel %vm290, %v292, %v284
        %v295 = vadd.s32 %v269, 4294967279
        %v296 = vadd.s32 %v270, 4294967279
        %vm297 = vcmp.ge.s32.totalorder %v295, 0
        %vm298 = vcmp.ge.s32.totalorder %v296, 0
        %vm299 = vcmp.lt.s32.totalorder %v295, 256
        %vm300 = vcmp.lt.s32.totalorder %v296, 256
        %vm301 = vmand %vm297, %vm299
        %vm302 = vmand %vm298, %vm300
        %v303 = vadd.s32 %v293, 4294967295
        %v304 = vadd.s32 %v294, 4294967295
        %vm305 = vcmp.ge.s32.totalorder %v303, 0
        %vm306 = vcmp.ge.s32.totalorder %v304, 0
        %vm307 = vmand %vm301, %vm305
        %vm308 = vmand %vm302, %vm306
        %vm309 = vcmp.lt.s32.totalorder %v303, 16
        %vm310 = vcmp.lt.s32.totalorder %v304, 16
        %vm311 = vmand %vm307, %vm309
        %vm312 = vmand %vm308, %vm310
        %v313 = vsel %vm311, 1, 0
        %v314 = vsel %vm312, 1, 0
        %v315 = vcvt.s32.f32 %v313
        %v316 = vcvt.s32.f32 %v314
        %v317 = vadd.s32 %v269, 4294967280
        %v318 = vadd.s32 %v270, 4294967280
        %vm319 = vcmp.ge.s32.totalorder %v317, 0
        %vm320 = vcmp.ge.s32.totalorder %v318, 0
        %vm321 = vcmp.lt.s32.totalorder %v317, 256
        %vm322 = vcmp.lt.s32.totalorder %v318, 256
        %vm323 = vmand %vm319, %vm321
        %vm324 = vmand %vm320, %vm322
        %vm325 = vcmp.ge.s32.totalorder %v293, 0
        %vm326 = vcmp.ge.s32.totalorder %v294, 0
        %vm327 = vmand %vm323, %vm325
        %vm328 = vmand %vm324, %vm326
        %vm329 = vcmp.lt.s32.totalorder %v293, 16
        %vm330 = vcmp.lt.s32.totalorder %v294, 16
        %vm331 = vmand %vm327, %vm329
        %vm332 = vmand %vm328, %vm330
        %v333 = vsel %vm331, 1, 0
        %v334 = vsel %vm332, 1, 0
        %v335 = vcvt.s32.f32 %v333
        %v336 = vcvt.s32.f32 %v334
        %v337 = vadd.s32 %v269, 4294967281
        %v338 = vadd.s32 %v270, 4294967281
        %vm339 = vcmp.ge.s32.totalorder %v337, 0
        %vm340 = vcmp.ge.s32.totalorder %v338, 0
        %vm341 = vcmp.lt.s32.totalorder %v337, 256
        %vm342 = vcmp.lt.s32.totalorder %v338, 256
        %vm343 = vmand %vm339, %vm341
        %vm344 = vmand %vm340, %vm342
        %v345 = vadd.s32 %v293, 1
        %v346 = vadd.s32 %v294, 1
        %vm347 = vcmp.ge.s32.totalorder %v345, 0
        %vm348 = vcmp.ge.s32.totalorder %v346, 0
        %vm349 = vmand %vm343, %vm347
        %vm350 = vmand %vm344, %vm348
        %vm351 = vcmp.lt.s32.totalorder %v345, 16
        %vm352 = vcmp.lt.s32.totalorder %v346, 16
        %vm353 = vmand %vm349, %vm351
        %vm354 = vmand %vm350, %vm352
        %v355 = vsel %vm353, 1, 0
        %v356 = vsel %vm354, 1, 0
        %v357 = vcvt.s32.f32 %v355
        %v358 = vcvt.s32.f32 %v356
        %v359 = vadd.s32 %v269, 4294967295
        %v360 = vadd.s32 %v270, 4294967295
        %vm361 = vcmp.ge.s32.totalorder %v359, 0
        %vm362 = vcmp.ge.s32.totalorder %v360, 0
        %vm363 = vcmp.lt.s32.totalorder %v359, 256
        %vm364 = vcmp.lt.s32.totalorder %v360, 256
        %vm365 = vmand %vm361, %vm363
        %vm366 = vmand %vm362, %vm364
        %vm367 = vmand %vm365, %vm305
        %vm368 = vmand %vm366, %vm306
        %vm369 = vmand %vm367, %vm309
        %vm370 = vmand %vm368, %vm310
        %v371 = vsel %vm369, 1, 0
        %v372 = vsel %vm370, 1, 0
        %v373 = vcvt.s32.f32 %v371
        %v374 = vcvt.s32.f32 %v372
        %v375 = vadd.s32 %v269, 1
        %v376 = vadd.s32 %v270, 1
        %vm377 = vcmp.ge.s32.totalorder %v375, 0
        %vm378 = vcmp.ge.s32.totalorder %v376, 0
        %vm379 = vcmp.lt.s32.totalorder %v375, 256
        %vm380 = vcmp.lt.s32.totalorder %v376, 256
        %vm381 = vmand %vm377, %vm379
        %vm382 = vmand %vm378, %vm380
        %vm383 = vmand %vm381, %vm347
        %vm384 = vmand %vm382, %vm348
        %vm385 = vmand %vm383, %vm351
        %vm386 = vmand %vm384, %vm352
        %v387 = vsel %vm385, 1, 0
        %v388 = vsel %vm386, 1, 0
        %v389 = vcvt.s32.f32 %v387
        %v390 = vcvt.s32.f32 %v388
        %v391 = vadd.s32 %v269, 15
        %v392 = vadd.s32 %v270, 15
        %vm393 = vcmp.ge.s32.totalorder %v391, 0
        %vm394 = vcmp.ge.s32.totalorder %v392, 0
        %vm395 = vcmp.lt.s32.totalorder %v391, 256
        %vm396 = vcmp.lt.s32.totalorder %v392, 256
        %vm397 = vmand %vm393, %vm395
        %vm398 = vmand %vm394, %vm396
        %vm399 = vmand %vm397, %vm305
        %vm400 = vmand %vm398, %vm306
        %vm401 = vmand %vm399, %vm309
        %vm402 = vmand %vm400, %vm310
        %v403 = vsel %vm401, 1, 0
        %v404 = vsel %vm402, 1, 0
        %v405 = vcvt.s32.f32 %v403
        %v406 = vcvt.s32.f32 %v404
        %v407 = vadd.s32 %v269, 16
        %v408 = vadd.s32 %v270, 16
        %vm409 = vcmp.ge.s32.totalorder %v407, 0
        %vm410 = vcmp.ge.s32.totalorder %v408, 0
        %vm411 = vcmp.lt.s32.totalorder %v407, 256
        %vm412 = vcmp.lt.s32.totalorder %v408, 256
        %vm413 = vmand %vm409, %vm411
        %vm414 = vmand %vm410, %vm412
        %vm415 = vmand %vm413, %vm325
        %vm416 = vmand %vm414, %vm326
        %vm417 = vmand %vm415, %vm329
        %vm418 = vmand %vm416, %vm330
        %v419 = vsel %vm417, 1, 0
        %v420 = vsel %vm418, 1, 0
        %v421 = vcvt.s32.f32 %v419
        %v422 = vcvt.s32.f32 %v420
        %v423 = vadd.s32 %v269, 17
        %v424 = vadd.s32 %v270, 17
        %vm425 = vcmp.ge.s32.totalorder %v423, 0
        %vm426 = vcmp.ge.s32.totalorder %v424, 0
        %vm427 = vcmp.lt.s32.totalorder %v423, 256
        %vm428 = vcmp.lt.s32.totalorder %v424, 256
        %vm429 = vmand %vm425, %vm427
        %vm430 = vmand %vm426, %vm428
        %vm431 = vmand %vm429, %vm347
        %vm432 = vmand %vm430, %vm348
        %vm433 = vmand %vm431, %vm351
        %vm434 = vmand %vm432, %vm352
        %v435 = vsel %vm433, 1, 0
        %v436 = vsel %vm434, 1, 0
        %v437 = vcvt.s32.f32 %v435
        %v438 = vcvt.s32.f32 %v436
        %v439 = vld [vmem:[%s239] sm:$0xff]
        %v440 = vld [vmem:[%s239 + $0x8] sm:$0xff]
        %v441 = vld [vmem:[%s1] sm:$0xff]
        %v442 = vld [vmem:[%s3] sm:$0xff]
        %v443 = vld [vmem:[%s2] sm:$0xff]
        %v444 = vld [vmem:[%s4] sm:$0xff]
        %v445 = vld [vmem:[%s5] sm:$0xff]
        %446 = vrot.lane.b32.xlu0 %v439, 17
        %v447 = vpop.permute.xlu0 %446
        %448 = vrot.lane.b32.xlu0 %v440, 17
        %v449 = vpop.permute.xlu0 %448
        %vm450 = vcmp.lt.s32.totalorder %v269, 17
        %v451 = vsel %vm450, %v447, %v449
        %v452 = vsel %vm450, %v449, %v447
        %v453 = vmul.f32 %v452, %v315
        %v454 = vmul.f32 %v451, %v316
        %455 = vrot.lane.b32.xlu0 %v439, 16
        %v456 = vpop.permute.xlu0 %455
        %457 = vrot.lane.b32.xlu0 %v440, 16
        %v458 = vpop.permute.xlu0 %457
        %vm459 = vcmp.lt.s32.totalorder %v269, 16
        %v460 = vsel %vm459, %v456, %v458
        %v461 = vsel %vm459, %v458, %v456
        %v462 = vmul.f32 %v461, %v335
        %v463 = vmul.f32 %v460, %v336
        %464 = vrot.lane.b32.xlu0 %v439, 15
        %v465 = vpop.permute.xlu0 %464
        %466 = vrot.lane.b32.xlu0 %v440, 15
        %v467 = vpop.permute.xlu0 %466
        %vm468 = vcmp.lt.s32.totalorder %v269, 15
        %v469 = vsel %vm468, %v465, %v467
        %v470 = vsel %vm468, %v467, %v465
        %v471 = vmul.f32 %v470, %v357
        %v472 = vmul.f32 %v469, %v358
        %473 = vrot.lane.b32.xlu0 %v439, 1
        %v474 = vpop.permute.xlu0 %473
        %475 = vrot.lane.b32.xlu0 %v440, 1
        %v476 = vpop.permute.xlu0 %475
        %vm477 = vcmp.lt.s32.totalorder %v269, 1
        %v478 = vsel %vm477, %v474, %v476
        %v479 = vsel %vm477, %v476, %v474
        %v480 = vmul.f32 %v479, %v373
        %v481 = vmul.f32 %v478, %v374
        %482 = vrot.lane.b32.xlu0 %v439, 127
        %v483 = vpop.permute.xlu0 %482
        %484 = vrot.lane.b32.xlu0 %v440, 127
        %v485 = vpop.permute.xlu0 %484
        %vm486 = vcmp.lt.s32.totalorder %v269, 127
        %v487 = vsel %vm486, %v483, %v485
        %v488 = vsel %vm486, %v485, %v483
        %v489 = vmul.f32 %v487, %v389
        %v490 = vmul.f32 %v488, %v390
        %491 = vrot.lane.b32.xlu0 %v439, 113
        %v492 = vpop.permute.xlu0 %491
        %493 = vrot.lane.b32.xlu0 %v440, 113
        %v494 = vpop.permute.xlu0 %493
        %vm495 = vcmp.lt.s32.totalorder %v269, 113
        %v496 = vsel %vm495, %v492, %v494
        %v497 = vsel %vm495, %v494, %v492
        %v498 = vmul.f32 %v496, %v405
        %v499 = vmul.f32 %v497, %v406
        %500 = vrot.lane.b32.xlu0 %v439, 112
        %v501 = vpop.permute.xlu0 %500
        %502 = vrot.lane.b32.xlu0 %v440, 112
        %v503 = vpop.permute.xlu0 %502
        %vm504 = vcmp.lt.s32.totalorder %v269, 112
        %v505 = vsel %vm504, %v501, %v503
        %v506 = vsel %vm504, %v503, %v501
        %v507 = vmul.f32 %v505, %v421
        %v508 = vmul.f32 %v506, %v422
        %509 = vrot.lane.b32.xlu0 %v439, 111
        %v510 = vpop.permute.xlu0 %509
        %511 = vrot.lane.b32.xlu0 %v440, 111
        %v512 = vpop.permute.xlu0 %511
        %vm513 = vcmp.lt.s32.totalorder %v269, 111
        %v514 = vsel %vm513, %v510, %v512
        %v515 = vsel %vm513, %v512, %v510
        %v516 = vmul.f32 %v514, %v437
        %v517 = vmul.f32 %v515, %v438
        %519 = vset.pattern.permute.xlu0 0
        %520 = vperm.xlu0 %519, %v443
        %v521 = vpop.permute.xlu0 %520
        %vm523 = vcmask 588800
        %v525 = vsel %vm523, %v441, 0
        %527 = vmatprep.subr.mxu0 0.0
        %528 = vmatpush1.msra.mxu0 0.0
        %529 = vmatprep.subr.mxu0 0.0
        %530 = vmatpush1.msra.mxu0 0.0
        %531 = vmatprep.subr.mxu0 0.0
        %532 = vmatpush1.msra.mxu0 0.0
        %533 = vmatprep.subr.mxu0 0.0
        %534 = vmatpush1.msra.mxu0 0.0
        %535 = vmatprep.subr.mxu0 0.0
        %536 = vmatpush1.msra.mxu0 0.0
        %537 = vmatprep.subr.mxu0 0.0
        %538 = vmatpush1.msra.mxu0 0.0
        %539 = vmatprep.subr.mxu0 0.0
        %540 = vmatpush1.msra.mxu0 0.0
        %541 = vmatprep.subr.mxu0 %v517
        %542 = vmatpush1.msra.mxu0 %v516
        %543 = vmatprep.subr.mxu0 %v508
        %544 = vmatpush1.msra.mxu0 %v507
        %545 = vmatprep.subr.mxu0 %v499
        %546 = vmatpush1.msra.mxu0 %v498
        %547 = vmatprep.subr.mxu0 %v490
        %548 = vmatpush1.msra.mxu0 %v489
        %549 = vmatprep.subr.mxu0 %v440
        %550 = vmatpush1.msra.mxu0 %v439
        %551 = vmatprep.subr.mxu0 %v481
        %552 = vmatpush1.msra.mxu0 %v480
        %553 = vmatprep.subr.mxu0 %v472
        %554 = vmatpush1.msra.mxu0 %v471
        %555 = vmatprep.subr.mxu0 %v463
        %556 = vmatpush1.msra.mxu0 %v462
        %557 = vmatprep.subr.mxu0 %v454
        %558 = vmatpush1.msra.mxu0 %v453
        %559 = vmatprep.subr.mxu0 0.0
        %560 = vmatpush2.msra.mxu0 0.0
        %561 = vmatprep.subr.mxu0 0.0
        %562 = vmatpush2.msra.mxu0 0.0
        %563 = vmatprep.subr.mxu0 0.0
        %564 = vmatpush2.msra.mxu0 0.0
        %565 = vmatprep.subr.mxu0 0.0
        %566 = vmatpush2.msra.mxu0 0.0
        %567 = vmatprep.subr.mxu0 0.0
        %568 = vmatpush2.msra.mxu0 0.0
        %569 = vmatprep.subr.mxu0 0.0
        %570 = vmatpush2.msra.mxu0 0.0
        %571 = vmatprep.subr.mxu0 0.0
        %572 = vmatpush2.msra.mxu0 0.0
        %573 = vmatprep.subr.mxu0 0.0
        %574 = vmatpush2.msra.mxu0 0.0
        %575 = vmatprep.subr.mxu0 0.0
        %576 = vmatpush2.msra.mxu0 0.0
        %577 = vmatprep.subr.mxu0 0.0
        %578 = vmatpush2.msra.mxu0 0.0
        %579 = vmatprep.subr.mxu0 0.0
        %580 = vmatpush2.msra.mxu0 0.0
        %581 = vmatprep.subr.mxu0 0.0
        %582 = vmatpush2.msra.mxu0 0.0
        %583 = vmatprep.subr.mxu0 0.0
        %584 = vmatpush2.msra.mxu0 0.0
        %585 = vmatprep.subr.mxu0 0.0
        %586 = vmatpush2.msra.mxu0 0.0
        %587 = vmatprep.subr.mxu0 0.0
        %588 = vmatpush2.msra.mxu0 0.0
        %589 = vmatprep.subr.mxu0 0.0
        %590 = vmatpush2.msra.mxu0 0.0
        %591 = vmatprep.mubr.f32.mxu0 0.0
        %592 = vmatmul.mubr.f32.gmra.mxu0 %v525
        %v593 = vpop.f32.mrf.mxu0
        %v594 = vadd.f32 %v521, %v593
        %v595 = vpop.f32.mrf.mxu0
        %v596 = vadd.f32 %v521, %v595
        %597 = vdwg.mxu0
        %vm598 = vcmp.gt.f32.partialorder %v594, 0.0
        %vm599 = vcmp.gt.f32.partialorder %v596, 0.0
        %601 = vset.pattern.permute.xlu0 0
        %602 = vperm.xlu0 %601, %v445
        %v603 = vpop.permute.xlu0 %602
        %v605 = vmul.f32 %v603, %v594
        %v606 = vmul.f32 %v603, %v596
        %v607 = vsel %vm598, %v594, %v605
        %v608 = vsel %vm599, %v596, %v606
        %609 = vrot.lane.b32.xlu0 %v607, 17
        %v610 = vpop.permute.xlu0 %609
        %611 = vrot.lane.b32.xlu0 %v608, 17
        %v612 = vpop.permute.xlu0 %611
        %v613 = vsel %vm450, %v610, %v612
        %v614 = vsel %vm450, %v612, %v610
        %v615 = vmul.f32 %v614, %v315
        %v616 = vmul.f32 %v613, %v316
        %617 = vrot.lane.b32.xlu0 %v607, 16
        %v618 = vpop.permute.xlu0 %617
        %619 = vrot.lane.b32.xlu0 %v608, 16
        %v620 = vpop.permute.xlu0 %619
        %v621 = vsel %vm459, %v618, %v620
        %v622 = vsel %vm459, %v620, %v618
        %v623 = vmul.f32 %v622, %v335
        %v624 = vmul.f32 %v621, %v336
        %625 = vrot.lane.b32.xlu0 %v607, 15
        %v626 = vpop.permute.xlu0 %625
        %627 = vrot.lane.b32.xlu0 %v608, 15
        %v628 = vpop.permute.xlu0 %627
        %v629 = vsel %vm468, %v626, %v628
        %v630 = vsel %vm468, %v628, %v626
        %v631 = vmul.f32 %v630, %v357
        %v632 = vmul.f32 %v629, %v358
        %633 = vrot.lane.b32.xlu0 %v607, 1
        %v634 = vpop.permute.xlu0 %633
        %635 = vrot.lane.b32.xlu0 %v608, 1
        %v636 = vpop.permute.xlu0 %635
        %v637 = vsel %vm477, %v634, %v636
        %v638 = vsel %vm477, %v636, %v634
        %v639 = vmul.f32 %v638, %v373
        %v640 = vmul.f32 %v637, %v374
        %641 = vrot.lane.b32.xlu0 %v607, 127
        %v642 = vpop.permute.xlu0 %641
        %643 = vrot.lane.b32.xlu0 %v608, 127
        %v644 = vpop.permute.xlu0 %643
        %v645 = vsel %vm486, %v642, %v644
        %v646 = vsel %vm486, %v644, %v642
        %v647 = vmul.f32 %v645, %v389
        %v648 = vmul.f32 %v646, %v390
        %649 = vrot.lane.b32.xlu0 %v607, 113
        %v650 = vpop.permute.xlu0 %649
        %651 = vrot.lane.b32.xlu0 %v608, 113
        %v652 = vpop.permute.xlu0 %651
        %v653 = vsel %vm495, %v650, %v652
        %v654 = vsel %vm495, %v652, %v650
        %v655 = vmul.f32 %v653, %v405
        %v656 = vmul.f32 %v654, %v406
        %657 = vrot.lane.b32.xlu0 %v607, 112
        %v658 = vpop.permute.xlu0 %657
        %659 = vrot.lane.b32.xlu0 %v608, 112
        %v660 = vpop.permute.xlu0 %659
        %v661 = vsel %vm504, %v658, %v660
        %v662 = vsel %vm504, %v660, %v658
        %v663 = vmul.f32 %v661, %v421
        %v664 = vmul.f32 %v662, %v422
        %665 = vrot.lane.b32.xlu0 %v607, 111
        %v666 = vpop.permute.xlu0 %665
        %667 = vrot.lane.b32.xlu0 %v608, 111
        %v668 = vpop.permute.xlu0 %667
        %v669 = vsel %vm513, %v666, %v668
        %v670 = vsel %vm513, %v668, %v666
        %v671 = vmul.f32 %v669, %v437
        %v672 = vmul.f32 %v670, %v438
        %674 = vset.pattern.permute.xlu0 0
        %675 = vperm.xlu0 %674, %v444
        %v676 = vpop.permute.xlu0 %675
        %v679 = vsel %vm523, %v442, 0
        %681 = vmatprep.subr.mxu0 0.0
        %682 = vmatpush1.msra.mxu0 0.0
        %683 = vmatprep.subr.mxu0 0.0
        %684 = vmatpush1.msra.mxu0 0.0
        %685 = vmatprep.subr.mxu0 0.0
        %686 = vmatpush1.msra.mxu0 0.0
        %687 = vmatprep.subr.mxu0 0.0
        %688 = vmatpush1.msra.mxu0 0.0
        %689 = vmatprep.subr.mxu0 0.0
        %690 = vmatpush1.msra.mxu0 0.0
        %691 = vmatprep.subr.mxu0 0.0
        %692 = vmatpush1.msra.mxu0 0.0
        %693 = vmatprep.subr.mxu0 0.0
        %694 = vmatpush1.msra.mxu0 0.0
        %695 = vmatprep.subr.mxu0 %v672
        %696 = vmatpush1.msra.mxu0 %v671
        %697 = vmatprep.subr.mxu0 %v664
        %698 = vmatpush1.msra.mxu0 %v663
        %699 = vmatprep.subr.mxu0 %v656
        %700 = vmatpush1.msra.mxu0 %v655
        %701 = vmatprep.subr.mxu0 %v648
        %702 = vmatpush1.msra.mxu0 %v647
        %703 = vmatprep.subr.mxu0 %v608
        %704 = vmatpush1.msra.mxu0 %v607
        %705 = vmatprep.subr.mxu0 %v640
        %706 = vmatpush1.msra.mxu0 %v639
        %707 = vmatprep.subr.mxu0 %v632
        %708 = vmatpush1.msra.mxu0 %v631
        %709 = vmatprep.subr.mxu0 %v624
        %710 = vmatpush1.msra.mxu0 %v623
        %711 = vmatprep.subr.mxu0 %v616
        %712 = vmatpush1.msra.mxu0 %v615
        %713 = vmatprep.subr.mxu0 0.0
        %714 = vmatpush2.msra.mxu0 0.0
        %715 = vmatprep.subr.mxu0 0.0
        %716 = vmatpush2.msra.mxu0 0.0
        %717 = vmatprep.subr.mxu0 0.0
        %718 = vmatpush2.msra.mxu0 0.0
        %719 = vmatprep.subr.mxu0 0.0
        %720 = vmatpush2.msra.mxu0 0.0
        %721 = vmatprep.subr.mxu0 0.0
        %722 = vmatpush2.msra.mxu0 0.0
        %723 = vmatprep.subr.mxu0 0.0
        %724 = vmatpush2.msra.mxu0 0.0
        %725 = vmatprep.subr.mxu0 0.0
        %726 = vmatpush2.msra.mxu0 0.0
        %727 = vmatprep.subr.mxu0 0.0
        %728 = vmatpush2.msra.mxu0 0.0
        %729 = vmatprep.subr.mxu0 0.0
        %730 = vmatpush2.msra.mxu0 0.0
        %731 = vmatprep.subr.mxu0 0.0
        %732 = vmatpush2.msra.mxu0 0.0
        %733 = vmatprep.subr.mxu0 0.0
        %734 = vmatpush2.msra.mxu0 0.0
        %735 = vmatprep.subr.mxu0 0.0
        %736 = vmatpush2.msra.mxu0 0.0
        %737 = vmatprep.subr.mxu0 0.0
        %738 = vmatpush2.msra.mxu0 0.0
        %739 = vmatprep.subr.mxu0 0.0
        %740 = vmatpush2.msra.mxu0 0.0
        %741 = vmatprep.subr.mxu0 0.0
        %742 = vmatpush2.msra.mxu0 0.0
        %743 = vmatprep.subr.mxu0 0.0
        %744 = vmatpush2.msra.mxu0 0.0
        %745 = vmatprep.mubr.f32.mxu0 0.0
        %746 = vmatmul.mubr.f32.gmra.mxu0 %v679
        %v747 = vpop.f32.mrf.mxu0
        %v748 = vadd.f32 %v676, %v747
        %v749 = vpop.f32.mrf.mxu0
        %v750 = vadd.f32 %v676, %v749
        %751 = vdwg.mxu0
        %v752 = vadd.f32 %v748, %v439
        %v753 = vadd.f32 %v750, %v440
        %754 = vst [vmem:[%s267] sm:$0xff] %v752
        %755 = vst [vmem:[%s267 + $0x8] sm:$0xff] %v753
        %s756 = sand.u32 %s162, 1
        %s757 = scalar_lea.sflag [#allocation4], %s756
        %s758 = sand.u32 %s162, 1
        %s759 = smul.addr %s758, 16
        %s760 = scalar_lea.vmem [#allocation5], %s759
        // Predicated region
        $region49: #{tpu_custom_call.1} parent=43 // pred_check
          %p761 = pneg %p172
        $region50: #{tpu_custom_call.1} parent=43 // pred_check_branch
          %763 = sbr.rel (%p761) target = $region52
        $region51: #{tpu_custom_call.1} parent=43 // pred_region
          %s765 = ssub.s32 256, 256
          %766 = vsyncadd %s757, %s765
          %s767 = smul.addr %s23, 2
          %s768 = smul.addr %s767, 128
          %s769 = scalar_lea.hbm %s6, %s768
          %s771 = sshll.u32 %s760, 4
          %s772 = int_to_ptr.vmem [resolvable:$true] %s771
          %774 = dma.vmem_to_hbm [thread:$0]  %s772, 256, %s769, %s757
        $region52: #{tpu_custom_call.1} parent=43 // pred_fallthru
          _
      $region44: #{tpu_custom_call.1} parent=5 // pred_fallthru
        _
      %p775 = scmp.le.s32.totalorder 2, %s18
      // Predicated region
      $region53: #{tpu_custom_call.1} parent=5 // pred_check
        %p776 = pneg %p775
      $region54: #{tpu_custom_call.1} parent=5 // pred_check_branch
        %778 = sbr.rel (%p776) target = $region56
      $region55: #{tpu_custom_call.1} parent=5 // pred_region
        %s779 = ssub.s32 %s18, 2
        // Predicated region
        $region57: #{tpu_custom_call.1} parent=55 // pred_check
          %p780 = pneg %p178
        $region58: #{tpu_custom_call.1} parent=55 // pred_check_branch
          %782 = sbr.rel (%p780) target = $region60
        $region59: #{tpu_custom_call.1} parent=55 // pred_region
          %s783 = sand.u32 %s163, 1
          %s784 = scalar_lea.sflag [#allocation4], %s783
          %s785 = sand.u32 %s163, 1
          %s786 = smul.addr %s785, 16
          %s787 = scalar_lea.vmem [#allocation5], %s786
          %788 = dma.done %s784, 256
        $region60: #{tpu_custom_call.1} parent=55 // pred_fallthru
          _
      $region56: #{tpu_custom_call.1} parent=5 // pred_fallthru
        _
    $region6: #{tpu_custom_call.1} parent=1 // loop_footer
      %s22 = sadd.s32 1, %s18
    $region7: #{tpu_custom_call.1} parent=1 // loop_footer_branch
      %17 = sbr.rel target = $region3
    $region8: #{tpu_custom_call.1} parent=1 // loop_exit
      _
    %789 = vsyncpa [#allocation3], 1
    %s790 = scalar_lea.sflag [#allocation3], 1
    %791 = vsyncpa %s790, 1
    %792 = vsyncpa [#allocation4], 1
    %s793 = scalar_lea.sflag [#allocation4], 1
    %794 = vsyncpa %s793, 1

</llo_original>
